<compile_context>
chip_gen: v6e
topology: v6e:2x2x1
jax: 0.10.0
libtpu: 0.0.40
codegen_flags: <defaults>
</compile_context>

<pallas_src>
import functools

import jax
import jax.numpy as jnp
from jax.experimental import pallas as pl
from jax.experimental.pallas import tpu as pltpu

LANE = 128
SUBLANE = 8
BLOCK_BYTES = 4 * 1024 * 1024        # per-input, per-block DMA budget (dtype-aware rows)
DEEP_BUFFER_MIN_TILES = 4            # only request 3-deep pipelining on long grids
VMEM_LIMIT_BYTES = 40 * 1024 * 1024  # 2 inputs * 3 bufs * 4 MiB + headroom (< 64 MiB v7x)


def _round_up(a, b):
    return -(-a // b) * b


def _make_kernel(block_rows, num_tiles, valid_last_rows, mode):
    """Per-tile partial-sum kernel: out[i] = fold_8x128(|x-y|) or ((x-y)^2)."""
    has_ragged = valid_last_rows != block_rows

    def emit(out_ref, d):
        v = jnp.abs(d) if mode == "l1" else d * d
        # (block_rows,128) -> (8,128) with pure vreg-wise VPU adds (no XLU work
        # in the hot loop); the single cross-lane reduction happens once in the
        # wrapper on a tiny (num_tiles,8,128) array.
        out_ref[...] = jnp.sum(
            v.reshape(block_rows // SUBLANE, SUBLANE, LANE), axis=0)[None]

    def kernel(x_ref, y_ref, out_ref):
        d = x_ref[...].astype(jnp.float32) - y_ref[...].astype(jnp.float32)

        if not has_ragged:
            emit(out_ref, d)
        else:
            # Runtime-gate the mask: only the single ragged-edge tile pays for
            # the iota + select; every other tile runs the mask-free path.
            i = pl.program_id(0)
            last = num_tiles - 1

            @pl.when(i != last)
            def _():
                emit(out_ref, d)

            @pl.when(i == last)
            def _():
                rows = jax.lax.broadcasted_iota(jnp.int32, (block_rows, LANE), 0)
                # Mask d BEFORE abs/square (select, not multiply) so unspecified
                # rows past the array end (possibly NaN/Inf) contribute exactly 0.
                emit(out_ref, jnp.where(rows < valid_last_rows, d, 0.0))

    return kernel


def _input_spec(block_rows, deep):
    index_map = lambda i: (i, 0)
    if deep:
        try:
            return pl.BlockSpec((block_rows, LANE), index_map,
                                pipeline_mode=pl.Buffered(3))
        except Exception:
            pass  # older API: fall back to default double-buffering
    return pl.BlockSpec((block_rows, LANE), index_map)


def _partial_sums(x2d, y2d, mode):
    """sum(|x-y|) ('l1') or sum((x-y)^2) ('mse') over a lane-dense (M,128) slab."""
    m_rows, lane = x2d.shape
    assert lane == LANE and m_rows >= SUBLANE

    itemsize = max(x2d.dtype.itemsize, y2d.dtype.itemsize)
    budget_rows = max(SUBLANE, BLOCK_BYTES // (LANE * itemsize))

    # Balanced tiling: all tiles the same 8-aligned size, never larger than the
    # array, so no tile is a fully-clamped duplicate and the ragged edge (if
    # any) is as full as possible.
    est_tiles = -(-m_rows // budget_rows)
    block_rows = _round_up(-(-m_rows // est_tiles), SUBLANE)
    block_rows = min(block_rows, m_rows - (m_rows % SUBLANE))
    num_tiles = -(-m_rows // block_rows)
    valid_last_rows = m_rows - (num_tiles - 1) * block_rows

    deep = num_tiles >= DEEP_BUFFER_MIN_TILES
    kernel = _make_kernel(block_rows, num_tiles, valid_last_rows, mode)

    out = pl.pallas_call(
        kernel,
        out_shape=jax.ShapeDtypeStruct((num_tiles, SUBLANE, LANE), jnp.float32),
        grid=(num_tiles,),
        in_specs=[_input_spec(block_rows, deep), _input_spec(block_rows, deep)],
        out_specs=pl.BlockSpec((1, SUBLANE, LANE), lambda i: (i, 0, 0)),
        compiler_params=pltpu.CompilerParams(
            dimension_semantics=("parallel",),
            vmem_limit_bytes=VMEM_LIMIT_BYTES,
        ),
    )(x2d, y2d)
    return jnp.sum(out)


def _elementwise_sum(x, y, mode):
    d = x.astype(jnp.float32) - y.astype(jnp.float32)
    return jnp.sum(jnp.abs(d)) if mode == "l1" else jnp.sum(d * d)


@functools.partial(jax.jit, static_argnames=("loss",))
def custom_loss(inp, target, loss="l1"):
    """Pallas equivalent of CustomLoss.forward for loss in {'l1', 'mse'}."""
    if loss not in ("l1", "mse"):
        # TODO(synk): 'vrmse' (VRMSE) and FFL are not defined in the provided
        # module source, so only the 'l1' and 'mse' branches are implemented.
        raise ValueError(f"Invalid loss function: {loss}")
    assert inp.shape == target.shape
    n_elems = inp.size

    # Flatten in the NATIVE dtype (no up-cast, no pad -> minimal HBM traffic).
    x = jnp.ravel(inp)
    y = jnp.ravel(target)

    m_rows = n_elems // LANE
    kernel_elems = m_rows * LANE if m_rows >= SUBLANE else 0

    total = jnp.float32(0.0)
    if kernel_elems:
        if kernel_elems == n_elems:          # zero-copy lane-dense reshape
            xk, yk = x, y
        else:                                # rare: n is not a multiple of 128
            xk, yk = x[:kernel_elems], y[:kernel_elems]
        total = total + _partial_sums(
            xk.reshape(m_rows, LANE), yk.reshape(m_rows, LANE), loss)
    if kernel_elems < n_elems:
        # <=127-element tail (or a <1024-element input): tiny jnp epilogue.
        total = total + _elementwise_sum(x[kernel_elems:], y[kernel_elems:], loss)

    return total / jnp.float32(n_elems)


if __name__ == "__main__":
    key = jax.random.PRNGKey(0)
    k1, k2, k3, k4, k5, k6 = jax.random.split(key, 6)

    # 1) Small video-shaped tensors (b, c, t, h, w), f32, single full tile.
    shape = (2, 4, 8, 16, 16)
    inp = jax.random.normal(k1, shape, dtype=jnp.float32)
    tgt = jax.random.normal(k2, shape, dtype=jnp.float32)

    l1_val = jax.block_until_ready(custom_loss(inp, tgt, loss="l1"))
    mse_val = jax.block_until_ready(custom_loss(inp, tgt, loss="mse"))
    ref_l1 = jnp.mean(jnp.abs(inp - tgt))
    ref_mse = jnp.mean((inp - tgt) ** 2)
    assert jnp.allclose(l1_val, ref_l1, rtol=1e-5, atol=1e-6), (l1_val, ref_l1)
    assert jnp.allclose(mse_val, ref_mse, rtol=1e-5, atol=1e-6), (mse_val, ref_mse)

    # 2) bf16, element count that is a multiple of 128 but not 1024: exercises
    #    the zero-copy reshape (no pad/slice copy) and the gated ragged mask.
    shape2 = (2, 8, 33, 36, 36)  # 684288 elems = 5346 * 128
    inp2 = jax.random.normal(k3, shape2, dtype=jnp.bfloat16)
    tgt2 = jax.random.normal(k4, shape2, dtype=jnp.bfloat16)
    l1_2 = jax.block_until_ready(custom_loss(inp2, tgt2, loss="l1"))
    mse_2 = jax.block_until_ready(custom_loss(inp2, tgt2, loss="mse"))
    i32, t32 = inp2.astype(jnp.float32), tgt2.astype(jnp.float32)
    ref_l1_2 = jnp.mean(jnp.abs(i32 - t32))
    ref_mse_2 = jnp.mean((i32 - t32) ** 2)
    assert jnp.allclose(l1_2, ref_l1_2, rtol=1e-4, atol=1e-6), (l1_2, ref_l1_2)
    assert jnp.allclose(mse_2, ref_mse_2, rtol=1e-4, atol=1e-6), (mse_2, ref_mse_2)

    # 3) Element count NOT a multiple of 128: kernel on the main slab + tiny
    #    jnp tail epilogue, plus the ragged-row mask inside the kernel.
    shape3 = (2, 3, 5, 7, 11)  # 2310 elems
    inp3 = jax.random.normal(k5, shape3, dtype=jnp.float32)
    tgt3 = jax.random.normal(k6, shape3, dtype=jnp.float32)
    l1_3 = jax.block_until_ready(custom_loss(inp3, tgt3, loss="l1"))
    mse_3 = jax.block_until_ready(custom_loss(inp3, tgt3, loss="mse"))
    ref_l1_3 = jnp.mean(jnp.abs(inp3 - tgt3))
    ref_mse_3 = jnp.mean((inp3 - tgt3) ** 2)
    assert jnp.allclose(l1_3, ref_l1_3, rtol=1e-5, atol=1e-6), (l1_3, ref_l1_3)
    assert jnp.allclose(mse_3, ref_mse_3, rtol=1e-5, atol=1e-6), (mse_3, ref_mse_3)

    # 4) Tiny input (< 1024 elems): pure-jnp path.
    tiny_a = jax.random.normal(k1, (3, 5, 7), dtype=jnp.float32)
    tiny_b = jax.random.normal(k2, (3, 5, 7), dtype=jnp.float32)
    l1_t = jax.block_until_ready(custom_loss(tiny_a, tiny_b, loss="l1"))
    assert jnp.allclose(l1_t, jnp.mean(jnp.abs(tiny_a - tiny_b)), rtol=1e-5, atol=1e-6)

    print("KERNEL_OK")
</pallas_src>

<mosaic_0001>
module attributes {stable_mosaic.version = 11 : i64} {
  func.func @kernel(%arg0: i32, %arg1: memref<128x128xf32, #tpu.memory_space<vmem>>, %arg2: memref<128x128xf32, #tpu.memory_space<vmem>>, %arg3: memref<1x8x128xf32, #tpu.memory_space<vmem>>) attributes {dimension_semantics = [#tpu.dimension_semantics<parallel>], iteration_bounds = array<i64: 1>, scalar_prefetch = 0 : i64, scratch_operands = 0 : i64, tpu.core_type = #tpu.core_type<tc>, window_params = [{transform_indices = @transform_0, window_bounds = array<i64: 128, 128>}, {transform_indices = @transform_1, window_bounds = array<i64: 128, 128>}, {transform_indices = @transform_2, window_bounds = array<i64: 1, 8, 128>}]} {
    %c0 = arith.constant 0 : index
    %c0_0 = arith.constant 0 : index
    %0 = vector.load %arg1[%c0, %c0_0] : memref<128x128xf32, #tpu.memory_space<vmem>>, vector<128x128xf32>
    %c0_1 = arith.constant 0 : index
    %c0_2 = arith.constant 0 : index
    %1 = vector.load %arg2[%c0_1, %c0_2] : memref<128x128xf32, #tpu.memory_space<vmem>>, vector<128x128xf32>
    %2 = arith.subf %0, %1 : vector<128x128xf32>
    %3 = math.absf %2 : vector<128x128xf32>
    %4 = vector.shape_cast %3 : vector<128x128xf32> to vector<16x8x128xf32>
    %cst = arith.constant dense<0.000000e+00> : vector<8x128xf32>
    %5 = vector.multi_reduction <add>, %4, %cst [0] : vector<16x8x128xf32> to vector<8x128xf32>
    %6 = vector.shape_cast %5 : vector<8x128xf32> to vector<1x8x128xf32>
    %c0_3 = arith.constant 0 : index
    %c0_4 = arith.constant 0 : index
    %c0_5 = arith.constant 0 : index
    %7 = vector.load %arg3[%c0_3, %c0_4, %c0_5] : memref<1x8x128xf32, #tpu.memory_space<vmem>>, vector<1x8x128xf32>
    tpu.vector_store %arg3[%c0_3, %c0_4, %c0_5], %6 {strides = array<i32>} : memref<1x8x128xf32, #tpu.memory_space<vmem>>, vector<1x8x128xf32>,
    return
  }
  func.func @transform_0(%arg0: i32) -> (i32, i32) {
    %c0_i32 = arith.constant 0 : i32
    %c0_i32_0 = arith.constant 0 : i32
    return %arg0, %c0_i32 : i32, i32
  }
  func.func @transform_1(%arg0: i32) -> (i32, i32) {
    %c0_i32 = arith.constant 0 : i32
    %c0_i32_0 = arith.constant 0 : i32
    return %arg0, %c0_i32 : i32, i32
  }
  func.func @transform_2(%arg0: i32) -> (i32, i32, i32) {
    %c0_i32 = arith.constant 0 : i32
    %c0_i32_0 = arith.constant 0 : i32
    %c0_i32_1 = arith.constant 0 : i32
    return %arg0, %c0_i32, %c0_i32_0 : i32, i32, i32
  }
}

</mosaic_0001>

<llo_original>
// kernel: custom_loss.1
$region0: #{custom_loss.1}
  #allocation0 [shape = 'u32[]', space=smem, size = 0x4, offset = 0x4, fixed_abs, tag = 'smem constant byte address 0x4 - core index']
  #allocation1 [shape = 'u32[144,128]{1,0:T(1,128)}', space=vmem, size = 0x12000, scoped, tag = 'internal scratch']
  %s0 = inlined_call_operand.vmem [shape: f32[128,128], index: 0, kind: input, shape index: {}]
  %s1 = inlined_call_operand.vmem [shape: f32[128,128], index: 1, kind: input, shape index: {}]
  %s2 = inlined_call_operand.vmem [shape: f32[1,8,128], index: 2, kind: output, shape index: {}]
  %s3 = sld [smem:[#allocation0]]
  $region18: #{custom_loss.1} parent=0
    _
  %s5 = ssub.s32 1, %s3
  %s6 = scalar_select 0, %s5, %s3
  // Predicated region
  $region2: #{custom_loss.1} parent=0 // pred_check
    _
  $region3: #{custom_loss.1} parent=0 // pred_check_branch
    %8 = sbr.rel (0) target = $region5
  $region4: #{custom_loss.1} parent=0 // pred_region
    _
  $region5: #{custom_loss.1} parent=0 // pred_fallthru
    _
  // Predicated region
  $region6: #{custom_loss.1} parent=0 // pred_check
    _
  $region7: #{custom_loss.1} parent=0 // pred_check_branch
    %10 = sbr.rel (0) target = $region9
  $region8: #{custom_loss.1} parent=0 // pred_region
    _
  $region9: #{custom_loss.1} parent=0 // pred_fallthru
    _
  %v11 = vld [vmem:[%s0] sm:$0xff]
  %v12 = vld [vmem:[%s0 + $0x8] sm:$0xff]
  %v13 = vld [vmem:[%s0 + $0x10] sm:$0xff]
  %v14 = vld [vmem:[%s0 + $0x18] sm:$0xff]
  %v15 = vld [vmem:[%s0 + $0x20] sm:$0xff]
  %v16 = vld [vmem:[%s0 + $0x28] sm:$0xff]
  %v17 = vld [vmem:[%s0 + $0x30] sm:$0xff]
  %v18 = vld [vmem:[%s0 + $0x38] sm:$0xff]
  %v19 = vld [vmem:[%s0 + $0x40] sm:$0xff]
  %v20 = vld [vmem:[%s0 + $0x48] sm:$0xff]
  %v21 = vld [vmem:[%s0 + $0x50] sm:$0xff]
  %v22 = vld [vmem:[%s0 + $0x58] sm:$0xff]
  %v23 = vld [vmem:[%s0 + $0x60] sm:$0xff]
  %v24 = vld [vmem:[%s0 + $0x68] sm:$0xff]
  %v25 = vld [vmem:[%s0 + $0x70] sm:$0xff]
  %v26 = vld [vmem:[%s0 + $0x78] sm:$0xff]
  %v27 = vld [vmem:[%s1] sm:$0xff]
  %v28 = vld [vmem:[%s1 + $0x8] sm:$0xff]
  %v29 = vld [vmem:[%s1 + $0x10] sm:$0xff]
  %v30 = vld [vmem:[%s1 + $0x18] sm:$0xff]
  %v31 = vld [vmem:[%s1 + $0x20] sm:$0xff]
  %v32 = vld [vmem:[%s1 + $0x28] sm:$0xff]
  %v33 = vld [vmem:[%s1 + $0x30] sm:$0xff]
  %v34 = vld [vmem:[%s1 + $0x38] sm:$0xff]
  %v35 = vld [vmem:[%s1 + $0x40] sm:$0xff]
  %v36 = vld [vmem:[%s1 + $0x48] sm:$0xff]
  %v37 = vld [vmem:[%s1 + $0x50] sm:$0xff]
  %v38 = vld [vmem:[%s1 + $0x58] sm:$0xff]
  %v39 = vld [vmem:[%s1 + $0x60] sm:$0xff]
  %v40 = vld [vmem:[%s1 + $0x68] sm:$0xff]
  %v41 = vld [vmem:[%s1 + $0x70] sm:$0xff]
  %v42 = vld [vmem:[%s1 + $0x78] sm:$0xff]
  %v43 = vsub.f32 %v11, %v27
  %v44 = vsub.f32 %v12, %v28
  %v45 = vsub.f32 %v13, %v29
  %v46 = vsub.f32 %v14, %v30
  %v47 = vsub.f32 %v15, %v31
  %v48 = vsub.f32 %v16, %v32
  %v49 = vsub.f32 %v17, %v33
  %v50 = vsub.f32 %v18, %v34
  %v51 = vsub.f32 %v19, %v35
  %v52 = vsub.f32 %v20, %v36
  %v53 = vsub.f32 %v21, %v37
  %v54 = vsub.f32 %v22, %v38
  %v55 = vsub.f32 %v23, %v39
  %v56 = vsub.f32 %v24, %v40
  %v57 = vsub.f32 %v25, %v41
  %v58 = vsub.f32 %v26, %v42
  %v59 = vand.u32 2147483647, %v43
  %v60 = vand.u32 2147483647, %v44
  %v61 = vand.u32 2147483647, %v45
  %v62 = vand.u32 2147483647, %v46
  %v63 = vand.u32 2147483647, %v47
  %v64 = vand.u32 2147483647, %v48
  %v65 = vand.u32 2147483647, %v49
  %v66 = vand.u32 2147483647, %v50
  %v67 = vand.u32 2147483647, %v51
  %v68 = vand.u32 2147483647, %v52
  %v69 = vand.u32 2147483647, %v53
  %v70 = vand.u32 2147483647, %v54
  %v71 = vand.u32 2147483647, %v55
  %v72 = vand.u32 2147483647, %v56
  %v73 = vand.u32 2147483647, %v57
  %v74 = vand.u32 2147483647, %v58
  %v75 = vadd.f32 %v59, %v60
  %v76 = vadd.f32 %v75, %v61
  %v77 = vadd.f32 %v76, %v62
  %v78 = vadd.f32 %v77, %v63
  %v79 = vadd.f32 %v78, %v64
  %v80 = vadd.f32 %v79, %v65
  %v81 = vadd.f32 %v80, %v66
  %v82 = vadd.f32 %v81, %v67
  %v83 = vadd.f32 %v82, %v68
  %v84 = vadd.f32 %v83, %v69
  %v85 = vadd.f32 %v84, %v70
  %v86 = vadd.f32 %v85, %v71
  %v87 = vadd.f32 %v86, %v72
  %v88 = vadd.f32 %v87, %v73
  %v89 = vadd.f32 %v88, %v74
  %90 = vst [vmem:[%s2] sm:$0xff] %v89
  // Predicated region
  $region10: #{custom_loss.1} parent=0 // pred_check
    _
  $region11: #{custom_loss.1} parent=0 // pred_check_branch
    %92 = sbr.rel (0) target = $region13
  $region12: #{custom_loss.1} parent=0 // pred_region
    _
  $region13: #{custom_loss.1} parent=0 // pred_fallthru
    _
  // Predicated region
  $region14: #{custom_loss.1} parent=0 // pred_check
    _
  $region15: #{custom_loss.1} parent=0 // pred_check_branch
    %94 = sbr.rel (0) target = $region17
  $region16: #{custom_loss.1} parent=0 // pred_region
    _
  $region17: #{custom_loss.1} parent=0 // pred_fallthru
    _

</llo_original>
